<compile_context>
chip_gen: v5e
topology: v5e:2x2
jax: 0.10.0
libtpu: 0.0.40
codegen_flags: <defaults>
</compile_context>

<pallas_src>
import functools

import numpy as np
import jax
import jax.numpy as jnp
from jax.experimental import pallas as pl
from jax.experimental.pallas import tpu as pltpu

B = 2
H = W = 8
NPIX = H * W            # 64 pixels / board
NQ = B * NPIX           # 128 = (batch, pixel) packed on the lane axis
C0, C1, C2 = 12, 16, 32
ADD_DIM = 71
FC1_OUT, FC2_OUT, FCA_OUT = 256, 64, 64
COMB_IN = FC1_OUT + FC2_OUT + FCA_OUT    # 384
COMB_OUT = 128

_VMEM = pl.BlockSpec(memory_space=pltpu.MemorySpace.VMEM)


# ----------------------------------------------------------------------------
# Fused Pallas kernel
# ----------------------------------------------------------------------------
def _chessv_kernel(roll_like_jnp,
                   xcb_ref, bflat_ref, add_ref,
                   w1_ref, b1_ref, w2_ref, b2_ref,
                   fc1_w_ref, fc1_b_ref, fc2_w_ref, fc2_b_ref,
                   fca_w_ref, fca_b_ref, fcc1_w_ref, fcc1_b_ref,
                   fcc2_w_ref, fcc2_b_ref,
                   out_ref,
                   h2_ref, xflat_ref, comb_ref):
    # ----- per-tap boundary masks (shared by both conv layers) -------------
    q = jax.lax.broadcasted_iota(jnp.int32, (1, NQ), 1)
    p = q % NPIX
    row = p // W
    col = p % W
    masks = {}
    for t in range(9):
        dy, dx = t // 3 - 1, t % 3 - 1
        if (dy, dx) == (0, 0):
            continue
        valid = ((row + dy >= 0) & (row + dy < H) &
                 (col + dx >= 0) & (col + dx < W))
        masks[t] = jnp.where(valid, 1.0, 0.0).astype(jnp.float32)   # (1, NQ)

    # shift convention: we want  out[:, q] = in[:, q + d]
    sgn = -1 if roll_like_jnp else 1

    def conv3x3(h, w_ref, b_ref, cout):
        # h: (Cin, NQ); w_ref: (9, Cout, Cin); returns relu(conv+bias) (Cout, NQ)
        acc = jnp.zeros((cout, NQ), jnp.float32)
        for t in range(9):                      # static unroll over taps
            dy, dx = t // 3 - 1, t % 3 - 1
            d = dy * W + dx                     # flat pixel offset of this tap
            if d == 0:
                xm = h
            else:
                shifted = pltpu.roll(h, (sgn * d) % NQ, axis=1)   # XLU lane roll
                xm = shifted * masks[t]         # zero-padding at borders
            acc = acc + jnp.dot(w_ref[t], xm,
                                preferred_element_type=jnp.float32)
        return jnp.maximum(acc + b_ref[...], 0.0)

    h1 = conv3x3(xcb_ref[...], w1_ref, b1_ref, C1)     # (16, 128)
    h2 = conv3x3(h1, w2_ref, b2_ref, C2)               # (32, 128)
    h2_ref[...] = h2

    # ----- flatten to PyTorch channel-major order: xflat[b, c*64+p] --------
    for c in range(C2):
        for b in range(B):
            xflat_ref[b:b + 1, c * NPIX:(c + 1) * NPIX] = \
                h2_ref[c:c + 1, b * NPIX:(b + 1) * NPIX]

    # ----- FC head ----------------------------------------------------------
    xfc1 = jnp.maximum(
        jnp.dot(xflat_ref[...], fc1_w_ref[...],
                preferred_element_type=jnp.float32) + fc1_b_ref[...], 0.0)
    yfc2 = jnp.maximum(
        jnp.dot(bflat_ref[...], fc2_w_ref[...],
                preferred_element_type=jnp.float32) + fc2_b_ref[...], 0.0)
    zfca = jnp.maximum(
        jnp.dot(add_ref[...], fca_w_ref[...],
                preferred_element_type=jnp.float32) + fca_b_ref[...], 0.0)

    # concat([x, y, z]) realized by static-lane-offset stores into a VMEM
    # scratch, so fc_combined1 is one (B,384)@(384,128) matmul.
    comb_ref[:, 0:FC1_OUT] = xfc1
    comb_ref[:, FC1_OUT:FC1_OUT + FC2_OUT] = yfc2
    comb_ref[:, FC1_OUT + FC2_OUT:COMB_IN] = zfca

    comb = jnp.maximum(
        jnp.dot(comb_ref[...], fcc1_w_ref[...],
                preferred_element_type=jnp.float32) + fcc1_b_ref[...], 0.0)

    # final Linear(128, 1): VPU multiply + lane reduction (no 1-lane MXU op)
    out_ref[...] = (jnp.sum(comb * fcc2_w_ref[...], axis=-1, keepdims=True)
                    + fcc2_b_ref[...])


# ----------------------------------------------------------------------------
# Wrappers
# ----------------------------------------------------------------------------
def detect_roll_semantics():
    """True iff pltpu.roll matches jnp.roll (out[i] = in[i - shift])."""
    def probe(x_ref, o_ref):
        o_ref[...] = pltpu.roll(x_ref[...], 1, axis=1)

    x = jnp.broadcast_to(jnp.arange(128, dtype=jnp.float32), (8, 128))
    out = pl.pallas_call(
        probe,
        out_shape=jax.ShapeDtypeStruct((8, 128), jnp.float32),
        in_specs=[_VMEM], out_specs=_VMEM)(x)
    return bool(out[0, 0] == 127.0)


def chessv_forward(board_nchw, additional, params, *, roll_like_jnp=True):
    # channels on sublanes, (batch, pixel) on lanes  ->  (12, 128)
    x_cb = board_nchw.transpose(1, 0, 2, 3).reshape(C0, NQ)
    # raw-board flatten for fc2 (PyTorch board_tensor.view(B, -1) order)
    bflat = board_nchw.reshape(B, C0 * NPIX)

    kernel = functools.partial(_chessv_kernel, roll_like_jnp)
    return pl.pallas_call(
        kernel,
        out_shape=jax.ShapeDtypeStruct((B, 1), jnp.float32),
        in_specs=[_VMEM] * 17,
        out_specs=_VMEM,
        scratch_shapes=[
            pltpu.VMEM((C2, NQ), jnp.float32),         # h2    (32, 128)
            pltpu.VMEM((B, C2 * NPIX), jnp.float32),   # xflat (2, 2048)
            pltpu.VMEM((B, COMB_IN), jnp.float32),     # comb  (2, 384)
        ],
    )(x_cb, bflat, additional,
      params["w1t"], params["b1"], params["w2t"], params["b2"],
      params["fc1_w"], params["fc1_b"],
      params["fc2_w"], params["fc2_b"],
      params["fca_w"], params["fca_b"],
      params["fcc1_w"], params["fcc1_b"],
      params["fcc2_w"].T, params["fcc2_b"])


def reference_forward(board_nchw, additional, params):
    """Pure-JAX reference mirroring the PyTorch forward."""
    W1 = params["w1t"].reshape(3, 3, C1, C0).transpose(2, 3, 0, 1)   # OIHW
    W2 = params["w2t"].reshape(3, 3, C2, C1).transpose(2, 3, 0, 1)
    dn = ("NCHW", "OIHW", "NCHW")
    x = jax.lax.conv_general_dilated(board_nchw, W1, (1, 1), "SAME",
                                     dimension_numbers=dn)
    x = jax.nn.relu(x + params["b1"].reshape(1, C1, 1, 1))
    x = jax.lax.conv_general_dilated(x, W2, (1, 1), "SAME",
                                     dimension_numbers=dn)
    x = jax.nn.relu(x + params["b2"].reshape(1, C2, 1, 1))
    x = x.reshape(B, -1)
    x = jax.nn.relu(x @ params["fc1_w"] + params["fc1_b"])
    y = jax.nn.relu(board_nchw.reshape(B, -1) @ params["fc2_w"] + params["fc2_b"])
    z = jax.nn.relu(additional @ params["fca_w"] + params["fca_b"])
    comb = jnp.concatenate([x, y, z], axis=1)
    comb = jax.nn.relu(comb @ params["fcc1_w"] + params["fcc1_b"])
    return comb @ params["fcc2_w"] + params["fcc2_b"]


def init_params(key):
    def uni(k, shape, fan_in):
        bound = 1.0 / float(fan_in) ** 0.5
        return jax.random.uniform(k, shape, jnp.float32, -bound, bound)

    ks = jax.random.split(key, 14)
    return {
        # conv weights stored as (tap, Cout, Cin); taps in (ky, kx) row-major
        "w1t": uni(ks[0], (9, C1, C0), C0 * 9),
        "b1":  uni(ks[1], (C1, 1), C0 * 9),
        "w2t": uni(ks[2], (9, C2, C1), C1 * 9),
        "b2":  uni(ks[3], (C2, 1), C1 * 9),
        # linear weights stored as (in, out)
        "fc1_w": uni(ks[4], (C2 * NPIX, FC1_OUT), C2 * NPIX),
        "fc1_b": uni(ks[5], (1, FC1_OUT), C2 * NPIX),
        "fc2_w": uni(ks[6], (C0 * NPIX, FC2_OUT), C0 * NPIX),   # see TODO(synk)
        "fc2_b": uni(ks[7], (1, FC2_OUT), C0 * NPIX),
        "fca_w": uni(ks[8], (ADD_DIM, FCA_OUT), ADD_DIM),
        "fca_b": uni(ks[9], (1, FCA_OUT), ADD_DIM),
        "fcc1_w": uni(ks[10], (COMB_IN, COMB_OUT), COMB_IN),
        "fcc1_b": uni(ks[11], (1, COMB_OUT), COMB_IN),
        "fcc2_w": uni(ks[12], (COMB_OUT, 1), COMB_OUT),
        "fcc2_b": uni(ks[13], (1, 1), COMB_OUT),
    }


if __name__ == "__main__":
    key = jax.random.PRNGKey(0)
    kp, kb, ka = jax.random.split(key, 3)

    params = init_params(kp)
    board = jax.random.normal(kb, (B, C0, H, W), jnp.float32)       # (2, 12, 8, 8)
    additional = jax.random.normal(ka, (B, ADD_DIM), jnp.float32)   # (2, 71)

    roll_like_jnp = detect_roll_semantics()
    fwd = jax.jit(chessv_forward, static_argnames=("roll_like_jnp",))

    logit = jax.block_until_ready(
        fwd(board, additional, params, roll_like_jnp=roll_like_jnp))
    ref = jax.block_until_ready(reference_forward(board, additional, params))

    assert logit.shape == (B, 1), logit.shape
    np.testing.assert_allclose(np.asarray(logit), np.asarray(ref),
                               rtol=5e-4, atol=5e-4)
    print("KERNEL_OK")
</pallas_src>

<mosaic_0001>
module attributes {stable_mosaic.version = 11 : i64} {
  func.func @probe(%arg0: memref<8x128xf32, #tpu.memory_space<vmem>>, %arg1: memref<8x128xf32, #tpu.memory_space<vmem>>) attributes {dimension_semantics = [], scalar_prefetch = 0 : i64, scratch_operands = 0 : i64, tpu.core_type = #tpu.core_type<tc>} {
    %c0 = arith.constant 0 : index
    %c0_0 = arith.constant 0 : index
    %0 = vector.load %arg0[%c0, %c0_0] : memref<8x128xf32, #tpu.memory_space<vmem>>, vector<8x128xf32>
    %c1_i32 = arith.constant 1 : i32
    %1 = tpu.dynamic_rotate %0 by %c1_i32 dim 1 : vector<8x128xf32>, i32 -> vector<8x128xf32>
    %c0_1 = arith.constant 0 : index
    %c0_2 = arith.constant 0 : index
    %2 = vector.load %arg1[%c0_1, %c0_2] : memref<8x128xf32, #tpu.memory_space<vmem>>, vector<8x128xf32>
    tpu.vector_store %arg1[%c0_1, %c0_2], %1 {strides = array<i32>} : memref<8x128xf32, #tpu.memory_space<vmem>>, vector<8x128xf32>,
    return
  }
}

</mosaic_0001>

<llo_original>
// kernel: tpu_custom_call.1
$region0: #{tpu_custom_call.1}
  #allocation0 [shape = 'u32[]', space=smem, size = 0x4, offset = 0x4, fixed_abs, tag = 'smem constant byte address 0x4 - core index']
  #allocation1 [shape = 'u32[72,128]{1,0:T(1,128)}', space=vmem, size = 0x9000, scoped, tag = 'internal scratch']
  %s0 = inlined_call_operand.hbm [shape: f32[8,128], index: 0, kind: input, shape index: {}]
  %s1 = inlined_call_operand.hbm [shape: f32[8,128], index: 1, kind: output, shape index: {}]
  %s2 = sld [smem:[#allocation0]]
  $region18: #{tpu_custom_call.1} parent=0
    _
  %s4 = ssub.s32 1, %s2
  %s5 = scalar_select 0, %s4, %s2
  $region1: #{tpu_custom_call.1} parent=0
    #allocation2 [shape = 'u8[4096]{0}', space=vmem, size = 0x1000, scoped, tag = 'input window, operand 0, single buffered']
    #allocation3 [shape = 's32[1]{0}', space=sflag, size = 0x4, scoped, tag = 'scoped memory for tpu_custom_call.1']
    #allocation4 [shape = 's32[1]{0}', space=sflag, size = 0x4, scoped, tag = 'scoped memory for tpu_custom_call.1']
    #allocation5 [shape = 'u8[4096]{0}', space=vmem, size = 0x1000, scoped, tag = 'output window, operand 0, single buffered']
    %6 = vsyncpa [#allocation3], 0
    %7 = vsyncpa [#allocation4], 0
    // Predicated region
    $region2: #{tpu_custom_call.1} parent=1 // pred_check
      _
    $region3: #{tpu_custom_call.1} parent=1 // pred_check_branch
      %9 = sbr.rel (0) target = $region5
    $region4: #{tpu_custom_call.1} parent=1 // pred_region
      %11 = vsyncadd [#allocation3], 0
      %s13 = sshll.u32 %s0, 4
      %s14 = int_to_ptr.hbm [resolvable:$true] %s13
      %s15 = sshll.u32 [#allocation2], 4
      %s16 = int_to_ptr.vmem [resolvable:$true] %s15
      %18 = dma.hbm_to_vmem [thread:$0]  %s14, 128, %s16, [#allocation3]
    $region5: #{tpu_custom_call.1} parent=1 // pred_fallthru
      _
    // Predicated region
    $region6: #{tpu_custom_call.1} parent=1 // pred_check
      _
    $region7: #{tpu_custom_call.1} parent=1 // pred_check_branch
      %20 = sbr.rel (0) target = $region9
    $region8: #{tpu_custom_call.1} parent=1 // pred_region
      %22 = dma.done [#allocation3], 128
    $region9: #{tpu_custom_call.1} parent=1 // pred_fallthru
      _
    %v23 = vld [vmem:[#allocation2] sm:$0xff]
    %24 = vrot.lane.b32.xlu0 %v23, 1
    %v25 = vpop.permute.xlu0 %24
    %26 = vst [vmem:[#allocation5] sm:$0xff] %v25
    // Predicated region
    $region10: #{tpu_custom_call.1} parent=1 // pred_check
      _
    $region11: #{tpu_custom_call.1} parent=1 // pred_check_branch
      %28 = sbr.rel (0) target = $region13
    $region12: #{tpu_custom_call.1} parent=1 // pred_region
      %30 = vsyncadd [#allocation4], 0
      %s32 = sshll.u32 [#allocation5], 4
      %s33 = int_to_ptr.vmem [resolvable:$true] %s32
      %s34 = sshll.u32 %s1, 4
      %s35 = int_to_ptr.hbm [resolvable:$true] %s34
      %37 = dma.vmem_to_hbm [thread:$0]  %s33, 128, %s35, [#allocation4]
    $region13: #{tpu_custom_call.1} parent=1 // pred_fallthru
      _
    // Predicated region
    $region14: #{tpu_custom_call.1} parent=1 // pred_check
      _
    $region15: #{tpu_custom_call.1} parent=1 // pred_check_branch
      %39 = sbr.rel (0) target = $region17
    $region16: #{tpu_custom_call.1} parent=1 // pred_region
      %41 = dma.done [#allocation4], 128
    $region17: #{tpu_custom_call.1} parent=1 // pred_fallthru
      _
    %42 = vsyncpa [#allocation3], 1
    %43 = vsyncpa [#allocation4], 1

</llo_original>
